<compile_context>
chip_gen: v6e
topology: v6e:2x2x1
jax: 0.10.0
libtpu: 0.0.40
codegen_flags: <defaults>
</compile_context>

<pallas_src>
from functools import partial

import jax
import jax.numpy as jnp
from jax.experimental import pallas as pl
from jax.experimental.pallas import tpu as pltpu


# ------------------------------- fused kernel ---------------------------------------
def _fused_kernel(x_ref, wfc_ref, shift_ref, whead_ref, bhead_ref,
                  out_ref, acc_ref, *, inv_hw, n_sig, kn_num):
    c = pl.program_id(1)

    @pl.when(c == 0)
    def _init():
        acc_ref[...] = jnp.zeros_like(acc_ref)

    # Partial global-average-pool on a lane-dense (b_tile, c_tile, HW) block,
    # immediately contracted against the matching fc-weight slice (BN scale folded in).
    x = x_ref[...].astype(jnp.float32)
    pooled = jnp.sum(x, axis=-1) * inv_hw                                  # (b_tile, c_tile)
    acc_ref[...] += jnp.dot(pooled, wfc_ref[...],
                            preferred_element_type=jnp.float32)            # (b_tile, A)

    @pl.when(c == pl.num_programs(1) - 1)
    def _heads():
        a = jnp.maximum(acc_ref[...] + shift_ref[...], 0.0)                # BN shift + ReLU
        # One lane-dense matmul for all four heads (1/temperature folded into w/b).
        z = (jnp.dot(a, whead_ref[...], preferred_element_type=jnp.float32)
             + bhead_ref[...])                                             # (b_tile, n_pad)
        idx = jax.lax.broadcasted_iota(jnp.int32, z.shape, 1)
        kn_mask = (idx >= n_sig) & (idx < n_sig + kn_num)
        # Softmax restricted to the kernel-attention lanes.
        zk = jnp.where(kn_mask, z, jnp.float32(-1e30))
        m = jnp.max(zk, axis=-1, keepdims=True)
        e = jnp.where(kn_mask, jnp.exp(zk - m), 0.0)
        soft = e * pl.reciprocal(jnp.sum(e, axis=-1, keepdims=True), approx=True)
        out = jnp.where(kn_mask, soft, jax.nn.sigmoid(z))
        out_ref[...] = out.astype(out_ref.dtype)                           # one packed store


# ------------------------------------- wrapper --------------------------------------
def omni_attention(x, params, *, kernel_size, kernel_num, temperature=1.0,
                   eps=1e-5, c_tile=None):
    B, C, H, W = x.shape
    A = params["w_fc"].shape[0]
    C_out = params["w_fl"].shape[0]
    KK = kernel_size * kernel_size
    KN = kernel_num
    HW = H * W

    n_sig = C + C_out + KK
    n_tot = n_sig + KN
    n_pad = ((n_tot + 127) // 128) * 128

    # Fold BatchNorm (inference) and 1/temperature into the tiny 1x1-conv weights.
    scale = (params["bn_gamma"] * jax.lax.rsqrt(params["bn_var"] + eps)).astype(jnp.float32)
    shift = (params["bn_beta"] - params["bn_mean"] * scale).astype(jnp.float32).reshape(1, A)
    wfc = params["w_fc"].astype(jnp.float32).T * scale[None, :]            # (C, A)
    inv_t = 1.0 / float(temperature)
    w_all = jnp.concatenate([params["w_ch"], params["w_fl"],
                             params["w_sp"], params["w_kn"]], axis=0).astype(jnp.float32)
    b_all = jnp.concatenate([params["b_ch"], params["b_fl"],
                             params["b_sp"], params["b_kn"]], axis=0).astype(jnp.float32)
    whead = jnp.pad(w_all.T * inv_t, ((0, 0), (0, n_pad - n_tot)))          # (A, n_pad)
    bhead = jnp.pad(b_all * inv_t, (0, n_pad - n_tot)).reshape(1, n_pad)

    # Tile selection: keep the double-buffered input under ~16 MiB (safe for v7x VMEM).
    b_tile = 8 if (B > 8 and B % 8 == 0) else B
    n_bt = B // b_tile
    if c_tile is None:
        budget = 8 * 1024 * 1024                      # per input buffer
        max_ct = max(8, budget // max(b_tile * HW * 4, 1))
        if C <= max_ct:
            c_tile = C
        else:
            c_tile = C
            cand = (min(max_ct, C) // 8) * 8
            while cand >= 8:
                if C % cand == 0:
                    c_tile = cand
                    break
                cand -= 8
    assert C % c_tile == 0, "C must be divisible by c_tile"
    n_ct = C // c_tile

    x3 = x.reshape(B, C, HW)                          # lane-dense last dim
    out_dtype = x.dtype

    cost = pl.CostEstimate(
        flops=B * C * HW + 2 * B * C * A + 2 * B * A * n_pad + 8 * B * n_pad,
        transcendentals=B * (n_pad + KN),
        bytes_accessed=(x3.size * x3.dtype.itemsize
                        + 4 * (C * A + A + A * n_pad + n_pad)
                        + B * n_pad * jnp.dtype(out_dtype).itemsize),
    )

    packed = pl.pallas_call(
        partial(_fused_kernel, inv_hw=1.0 / float(HW), n_sig=n_sig, kn_num=KN),
        out_shape=jax.ShapeDtypeStruct((B, n_pad), out_dtype),
        grid=(n_bt, n_ct),
        in_specs=[
            pl.BlockSpec((b_tile, c_tile, HW), lambda b, c: (b, c, 0)),
            pl.BlockSpec((c_tile, A), lambda b, c: (c, 0)),
            pl.BlockSpec((1, A), lambda b, c: (0, 0)),
            pl.BlockSpec((A, n_pad), lambda b, c: (0, 0)),
            pl.BlockSpec((1, n_pad), lambda b, c: (0, 0)),
        ],
        out_specs=pl.BlockSpec((b_tile, n_pad), lambda b, c: (b, 0)),
        scratch_shapes=[pltpu.VMEM((b_tile, A), jnp.float32)],
        compiler_params=pltpu.CompilerParams(
            dimension_semantics=("parallel", "arbitrary"),
            vmem_limit_bytes=32 * 1024 * 1024),
        cost_estimate=cost,
    )(x3, wfc, shift, whead, bhead)

    # Slice the packed lane-dense output back into the four PyTorch-shaped attentions.
    ch = packed[:, :C]
    fl = packed[:, C:C + C_out]
    sp = packed[:, C + C_out:n_sig]
    kn = packed[:, n_sig:n_tot]
    return (ch.reshape(B, C, 1, 1),
            fl.reshape(B, C_out, 1, 1),
            sp.reshape(B, 1, 1, 1, kernel_size, kernel_size),
            kn.reshape(B, KN, 1, 1, 1, 1))


# --------------------------------- pure-JAX reference --------------------------------
def _reference(x, p, *, kernel_size, kernel_num, temperature=1.0, eps=1e-5):
    B, C, H, W = x.shape
    pool = jnp.mean(x.astype(jnp.float32), axis=(2, 3))                       # (B, C)
    a = jnp.dot(pool, p["w_fc"].T, precision=jax.lax.Precision.HIGHEST)       # (B, A)
    a = (a - p["bn_mean"]) / jnp.sqrt(p["bn_var"] + eps) * p["bn_gamma"] + p["bn_beta"]
    a = jnp.maximum(a, 0.0)

    def head(w, b):
        return (jnp.dot(a, w.T, precision=jax.lax.Precision.HIGHEST) + b) / temperature

    ch = jax.nn.sigmoid(head(p["w_ch"], p["b_ch"]))
    fl = jax.nn.sigmoid(head(p["w_fl"], p["b_fl"]))
    sp = jax.nn.sigmoid(head(p["w_sp"], p["b_sp"]))
    kn = jax.nn.softmax(head(p["w_kn"], p["b_kn"]), axis=-1)
    k = kernel_size
    return (ch.reshape(B, C, 1, 1), fl.reshape(B, -1, 1, 1),
            sp.reshape(B, 1, 1, 1, k, k), kn.reshape(B, kernel_num, 1, 1, 1, 1))


if __name__ == "__main__":
    # Module hyper-parameters (full, non-skip path: groups != in_planes, k>1, kernel_num>1).
    B, C_in, C_out, H, W = 2, 32, 32, 16, 16
    kernel_size, kernel_num, reduction, min_channel = 3, 4, 0.0625, 16
    A = max(int(C_in * reduction), min_channel)           # attention_channel = 16
    temperature = 1.0

    key = jax.random.PRNGKey(0)
    keys = jax.random.split(key, 14)
    x = jax.random.normal(keys[0], (B, C_in, H, W), jnp.float32)
    params = dict(
        w_fc=0.3 * jax.random.normal(keys[1], (A, C_in), jnp.float32),
        bn_gamma=1.0 + 0.1 * jax.random.normal(keys[2], (A,), jnp.float32),
        bn_beta=0.1 * jax.random.normal(keys[3], (A,), jnp.float32),
        bn_mean=0.1 * jax.random.normal(keys[4], (A,), jnp.float32),
        bn_var=jnp.abs(1.0 + 0.1 * jax.random.normal(keys[5], (A,), jnp.float32)),
        w_ch=0.3 * jax.random.normal(keys[6], (C_in, A), jnp.float32),
        b_ch=0.1 * jax.random.normal(keys[7], (C_in,), jnp.float32),
        w_fl=0.3 * jax.random.normal(keys[8], (C_out, A), jnp.float32),
        b_fl=0.1 * jax.random.normal(keys[9], (C_out,), jnp.float32),
        w_sp=0.3 * jax.random.normal(keys[10], (kernel_size * kernel_size, A), jnp.float32),
        b_sp=0.1 * jax.random.normal(keys[11], (kernel_size * kernel_size,), jnp.float32),
        w_kn=0.3 * jax.random.normal(keys[12], (kernel_num, A), jnp.float32),
        b_kn=0.1 * jax.random.normal(keys[13], (kernel_num,), jnp.float32),
    )

    # c_tile=16 exercises the C-tile accumulation path (grid = (1, 2)).
    fn = jax.jit(partial(omni_attention, kernel_size=kernel_size,
                         kernel_num=kernel_num, temperature=temperature, c_tile=16))
    outs = jax.block_until_ready(fn(x, params))

    refs = _reference(x, params, kernel_size=kernel_size,
                      kernel_num=kernel_num, temperature=temperature)
    for name, o, r in zip(("channel", "filter", "spatial", "kernel"), outs, refs):
        assert o.shape == r.shape, (name, o.shape, r.shape)
        err = float(jnp.max(jnp.abs(o.astype(jnp.float32) - r)))
        assert jnp.allclose(o, r, atol=2e-3, rtol=2e-3), f"{name} max abs err {err}"
    print("KERNEL_OK")
</pallas_src>

<mosaic_0001>
module attributes {stable_mosaic.version = 11 : i64} {
  func.func @_fused_kernel(%arg0: i32, %arg1: i32, %arg2: memref<2x16x256xf32, #tpu.memory_space<vmem>>, %arg3: memref<16x16xf32, #tpu.memory_space<vmem>>, %arg4: memref<1x16xf32, #tpu.memory_space<vmem>>, %arg5: memref<16x128xf32, #tpu.memory_space<vmem>>, %arg6: memref<1x128xf32, #tpu.memory_space<vmem>>, %arg7: memref<2x128xf32, #tpu.memory_space<vmem>>, %arg8: memref<2x16xf32, #tpu.memory_space<vmem>>) attributes {dimension_semantics = [#tpu.dimension_semantics<parallel>, #tpu.dimension_semantics<arbitrary>], iteration_bounds = array<i64: 1, 2>, scalar_prefetch = 0 : i64, scratch_operands = 1 : i64, tpu.core_type = #tpu.core_type<tc>, window_params = [{transform_indices = @transform_0, window_bounds = array<i64: 2, 16, 256>}, {transform_indices = @transform_1, window_bounds = array<i64: 16, 16>}, {pipeline_mode = #tpu.pipeline_mode<synchronous>, transform_indices = @transform_2, window_bounds = array<i64: 1, 16>}, {pipeline_mode = #tpu.pipeline_mode<synchronous>, transform_indices = @transform_3, window_bounds = array<i64: 16, 128>}, {pipeline_mode = #tpu.pipeline_mode<synchronous>, transform_indices = @transform_4, window_bounds = array<i64: 1, 128>}, {transform_indices = @transform_5, window_bounds = array<i64: 2, 128>}]} {
    %c0_i32 = arith.constant 0 : i32
    %0 = arith.cmpi eq, %arg1, %c0_i32 : i32
    %1 = arith.extui %0 : i1 to i32
    %c0_i32_0 = arith.constant 0 : i32
    %2 = arith.cmpi ne, %1, %c0_i32_0 : i32
    scf.if %2 {
      %cst_12 = arith.constant 0.000000e+00 : f32
      %15 = vector.broadcast %cst_12 : f32 to vector<2x16xf32>
      %c0_13 = arith.constant 0 : index
      %c0_14 = arith.constant 0 : index
      %16 = vector.load %arg8[%c0_13, %c0_14] : memref<2x16xf32, #tpu.memory_space<vmem>>, vector<2x16xf32>
      tpu.vector_store %arg8[%c0_13, %c0_14], %15 {strides = array<i32>} : memref<2x16xf32, #tpu.memory_space<vmem>>, vector<2x16xf32>,
    } else {
    }
    %c0 = arith.constant 0 : index
    %c0_1 = arith.constant 0 : index
    %c0_2 = arith.constant 0 : index
    %3 = vector.load %arg2[%c0, %c0_1, %c0_2] : memref<2x16x256xf32, #tpu.memory_space<vmem>>, vector<2x16x256xf32>
    %cst = arith.constant dense<0.000000e+00> : vector<2x16xf32>
    %4 = vector.multi_reduction <add>, %3, %cst [2] : vector<2x16x256xf32> to vector<2x16xf32>
    %cst_3 = arith.constant 3.906250e-03 : f32
    %5 = vector.broadcast %cst_3 : f32 to vector<2x16xf32>
    %6 = arith.mulf %4, %5 : vector<2x16xf32>
    %c0_4 = arith.constant 0 : index
    %c0_5 = arith.constant 0 : index
    %7 = vector.load %arg8[%c0_4, %c0_5] : memref<2x16xf32, #tpu.memory_space<vmem>>, vector<2x16xf32>
    %c0_6 = arith.constant 0 : index
    %c0_7 = arith.constant 0 : index
    %8 = vector.load %arg3[%c0_6, %c0_7] : memref<16x16xf32, #tpu.memory_space<vmem>>, vector<16x16xf32>
    %cst_8 = arith.constant dense<0.000000e+00> : vector<2x16xf32>
    %9 = tpu.matmul %6, %8, %cst_8 {dimension_numbers = #tpu.dot_dimension_numbers<[1], [0], [0], [1], [0, 0, 1, 1], [], []>} : vector<2x16xf32>, vector<16x16xf32>, vector<2x16xf32> -> vector<2x16xf32>
    %10 = arith.addf %7, %9 : vector<2x16xf32>
    %c0_9 = arith.constant 0 : index
    %c0_10 = arith.constant 0 : index
    %11 = vector.load %arg8[%c0_9, %c0_10] : memref<2x16xf32, #tpu.memory_space<vmem>>, vector<2x16xf32>
    tpu.vector_store %arg8[%c0_9, %c0_10], %10 {strides = array<i32>} : memref<2x16xf32, #tpu.memory_space<vmem>>, vector<2x16xf32>,
    %c1_i32 = arith.constant 1 : i32
    %12 = arith.cmpi eq, %arg1, %c1_i32 : i32
    %13 = arith.extui %12 : i1 to i32
    %c0_i32_11 = arith.constant 0 : i32
    %14 = arith.cmpi ne, %13, %c0_i32_11 : i32
    scf.if %14 {
      %c0_12 = arith.constant 0 : index
      %c0_13 = arith.constant 0 : index
      %15 = vector.load %arg8[%c0_12, %c0_13] : memref<2x16xf32, #tpu.memory_space<vmem>>, vector<2x16xf32>
      %c0_14 = arith.constant 0 : index
      %c0_15 = arith.constant 0 : index
      %16 = vector.load %arg4[%c0_14, %c0_15] : memref<1x16xf32, #tpu.memory_space<vmem>>, vector<1x16xf32>
      %17 = vector.broadcast %16 : vector<1x16xf32> to vector<2x16xf32>
      %18 = arith.addf %15, %17 : vector<2x16xf32>
      %cst_16 = arith.constant 0.000000e+00 : f32
      %19 = vector.broadcast %cst_16 : f32 to vector<2x16xf32>
      %20 = arith.maximumf %18, %19 : vector<2x16xf32>
      %c0_17 = arith.constant 0 : index
      %c0_18 = arith.constant 0 : index
      %21 = vector.load %arg5[%c0_17, %c0_18] : memref<16x128xf32, #tpu.memory_space<vmem>>, vector<16x128xf32>
      %cst_19 = arith.constant dense<0.000000e+00> : vector<2x128xf32>
      %22 = tpu.matmul %20, %21, %cst_19 {dimension_numbers = #tpu.dot_dimension_numbers<[1], [0], [0], [1], [0, 0, 1, 1], [], []>} : vector<2x16xf32>, vector<16x128xf32>, vector<2x128xf32> -> vector<2x128xf32>
      %c0_20 = arith.constant 0 : index
      %c0_21 = arith.constant 0 : index
      %23 = vector.load %arg6[%c0_20, %c0_21] : memref<1x128xf32, #tpu.memory_space<vmem>>, vector<1x128xf32>
      %24 = vector.broadcast %23 : vector<1x128xf32> to vector<2x128xf32>
      %25 = arith.addf %22, %24 : vector<2x128xf32>
      %26 = tpu.iota {dimensions = array<i32: 1>} : vector<2x128xi32>
      %c73_i32 = arith.constant 73 : i32
      %27 = vector.broadcast %c73_i32 : i32 to vector<2x128xi32>
      %28 = arith.cmpi sge, %26, %27 : vector<2x128xi32>
      %c77_i32 = arith.constant 77 : i32
      %29 = vector.broadcast %c77_i32 : i32 to vector<2x128xi32>
      %30 = arith.cmpi slt, %26, %29 : vector<2x128xi32>
      %31 = arith.andi %28, %30 : vector<2x128xi1>
      %cst_22 = arith.constant -1.000000e+30 : f32
      %32 = vector.broadcast %cst_22 : f32 to vector<2x128xf32>
      %33 = arith.select %31, %25, %32 : vector<2x128xi1>, vector<2x128xf32>
      %cst_23 = arith.constant dense<0xFF800000> : vector<2xf32>
      %34 = vector.multi_reduction <maximumf>, %33, %cst_23 [1] : vector<2x128xf32> to vector<2xf32>
      %35 = vector.shape_cast %34 : vector<2xf32> to vector<2x1xf32>
      %36 = vector.broadcast %35 : vector<2x1xf32> to vector<2x128xf32>
      %37 = arith.subf %33, %36 : vector<2x128xf32>
      %38 = math.exp %37 : vector<2x128xf32>
      %cst_24 = arith.constant 0.000000e+00 : f32
      %39 = vector.broadcast %cst_24 : f32 to vector<2x128xf32>
      %40 = arith.select %31, %38, %39 : vector<2x128xi1>, vector<2x128xf32>
      %cst_25 = arith.constant dense<0.000000e+00> : vector<2xf32>
      %41 = vector.multi_reduction <add>, %40, %cst_25 [1] : vector<2x128xf32> to vector<2xf32>
      %42 = vector.shape_cast %41 : vector<2xf32> to vector<2x1xf32>
      %43 = tpu.reciprocal %42 {approx = true} : vector<2x1xf32> -> vector<2x1xf32>
      %44 = vector.broadcast %43 : vector<2x1xf32> to vector<2x128xf32>
      %45 = arith.mulf %40, %44 : vector<2x128xf32>
      %46 = arith.negf %25 : vector<2x128xf32>
      %47 = math.exp %46 : vector<2x128xf32>
      %cst_26 = arith.constant 1.000000e+00 : f32
      %48 = vector.broadcast %cst_26 : f32 to vector<2x128xf32>
      %49 = arith.addf %48, %47 : vector<2x128xf32>
      %50 = arith.divf %48, %49 : vector<2x128xf32>
      %51 = arith.select %31, %45, %50 : vector<2x128xi1>, vector<2x128xf32>
      %c0_27 = arith.constant 0 : index
      %c0_28 = arith.constant 0 : index
      %52 = vector.load %arg7[%c0_27, %c0_28] : memref<2x128xf32, #tpu.memory_space<vmem>>, vector<2x128xf32>
      tpu.vector_store %arg7[%c0_27, %c0_28], %51 {strides = array<i32>} : memref<2x128xf32, #tpu.memory_space<vmem>>, vector<2x128xf32>,
    } else {
    }
    return
  }
  func.func @transform_0(%arg0: i32, %arg1: i32) -> (i32, i32, i32) {
    %c0_i32 = arith.constant 0 : i32
    %c0_i32_0 = arith.constant 0 : i32
    return %arg0, %arg1, %c0_i32 : i32, i32, i32
  }
  func.func @transform_1(%arg0: i32, %arg1: i32) -> (i32, i32) {
    %c0_i32 = arith.constant 0 : i32
    %c0_i32_0 = arith.constant 0 : i32
    return %arg1, %c0_i32 : i32, i32
  }
  func.func @transform_2(%arg0: i32, %arg1: i32) -> (i32, i32) {
    %c0_i32 = arith.constant 0 : i32
    %c0_i32_0 = arith.constant 0 : i32
    %c0_i32_1 = arith.constant 0 : i32
    return %c0_i32, %c0_i32_0 : i32, i32
  }
  func.func @transform_3(%arg0: i32, %arg1: i32) -> (i32, i32) {
    %c0_i32 = arith.constant 0 : i32
    %c0_i32_0 = arith.constant 0 : i32
    %c0_i32_1 = arith.constant 0 : i32
    return %c0_i32, %c0_i32_0 : i32, i32
  }
  func.func @transform_4(%arg0: i32, %arg1: i32) -> (i32, i32) {
    %c0_i32 = arith.constant 0 : i32
    %c0_i32_0 = arith.constant 0 : i32
    %c0_i32_1 = arith.constant 0 : i32
    return %c0_i32, %c0_i32_0 : i32, i32
  }
  func.func @transform_5(%arg0: i32, %arg1: i32) -> (i32, i32) {
    %c0_i32 = arith.constant 0 : i32
    %c0_i32_0 = arith.constant 0 : i32
    return %arg0, %c0_i32 : i32, i32
  }
}

</mosaic_0001>

<llo_original>
// kernel: omni_attention.1
$region0: #{omni_attention.1}
  #allocation0 [shape = 'u32[]', space=smem, size = 0x4, offset = 0x4, fixed_abs, tag = 'smem constant byte address 0x4 - core index']
  #allocation1 [shape = 'u32[144,128]{1,0:T(1,128)}', space=vmem, size = 0x12000, scoped, tag = 'internal scratch']
  #allocation2 [shape = 'f32[2,16]{1,0:T(2,128)}', space=vmem, size = 0x400, scoped, tag = 'scratch operand']
  %s0 = inlined_call_operand.vmem [shape: f32[2,32,256], index: 0, kind: input, shape index: {}]
  %s1 = inlined_call_operand.vmem [shape: f32[32,16], index: 1, kind: input, shape index: {}]
  %s2 = inlined_call_operand.vmem [shape: f32[1,16], index: 2, kind: input, shape index: {}]
  %s3 = inlined_call_operand.vmem [shape: f32[16,128], index: 3, kind: input, shape index: {}]
  %s4 = inlined_call_operand.vmem [shape: f32[1,128], index: 4, kind: input, shape index: {}]
  %s5 = inlined_call_operand.vmem [shape: f32[2,128], index: 5, kind: output, shape index: {}]
  %s6 = sld [smem:[#allocation0]]
  $region84: #{omni_attention.1} parent=0
    _
  %s8 = ssub.s32 1, %s6
  %s9 = scalar_select 0, %s8, %s6
  $region1: #{omni_attention.1} parent=0
    #allocation3 [shape = 'u8[65536]{0}', space=vmem, size = 0x10000, scoped, tag = 'input window, operand 0']
    loop: start=0, step=1, limit=4
    $region2: #{omni_attention.1} parent=1 // loop_pre_header
      _
    $region3: #{omni_attention.1} parent=1 // loop_header
      %s11 = sphi 0, %s15
      %p12 = scmp.ge.s32.totalorder %s11, 4
      %s18 = sphi 0, %s30
      %s19 = sphi 0, %s26
      %s20 = sphi 0, %s18
      %s21 = sphi 0, %s19
      %s22 = sphi 0, %s20
      %s23 = sphi 0, %s21
      %s35 = sphi 0, %s37
      %s38 = sphi 0, %s35
      %s39 = sphi 0, %s38
      %s55 = sphi 0, %s39
      %s61 = sphi 0, %s63
      %s64 = sphi 0, %s61
      %s65 = sphi 0, %s64
      %s81 = sphi 0, %s65
      %s85 = sphi 0, %s85
      %s87 = sphi 0, %s85
      %s88 = sphi 0, %s87
      %s102 = sphi 0, %s88
      %s106 = sphi 0, %s106
      %s108 = sphi 0, %s106
      %s109 = sphi 0, %s108
      %s123 = sphi 0, %s109
      %s127 = sphi 0, %s127
      %s129 = sphi 0, %s127
      %s130 = sphi 0, %s129
      %s144 = sphi 0, %s130
      %s150 = sphi 0, %s152
      %s153 = sphi 0, %s150
      %s154 = sphi 0, %s153
      %s170 = sphi 0, %s154
    $region4: #{omni_attention.1} parent=1 // loop_header_branch
      %14 = sbr.rel (%p12) target = $region8
    $region5: #{omni_attention.1} parent=1 // loop_body
      %s16 = ssub.s32 %s11, 1
      %s17 = ssub.s32 %s11, 2
      %s24 = sadd.s32 1, %s19
      %p25 = scmp.ge.s32.totalorder %s24, 2
      %s26 = scalar_select %p25, 0, %s24
      %s27 = sadd.s32 1, %s18
      %s28 = scalar_select %p25, %s27, %s18
      %p29 = scmp.ge.s32.totalorder %s28, 1
      %s30 = scalar_select %p29, 0, %s28
      %s31 = ssub.s32 %s18, %s30
      %s32 = ssub.s32 %s19, %s26
      %s33 = sor.u32 %s31, %s32
      %p34 = scmp.eq.s32.totalorder %s33, 0
      %s36 = sadd.s32 %s35, 1
      %s37 = scalar_select %p34, %s35, %s36
      %p40 = pneg %p34
      %p41 = scmp.eq.s32.totalorder %s11, 1
      %p42 = por %p40, %p41
      %p43 = scmp.ne.s32.totalorder %s35, %s38
      %p44 = scmp.eq.s32.totalorder %s11, 0
      %p45 = por %p43, %p44
      %p46 = scmp.ne.s32.totalorder %s35, %s38
      %p47 = scmp.eq.s32.totalorder %s16, 1
      %p48 = por %p46, %p47
      %p49 = scmp.ne.s32.totalorder %s38, %s39
      %p50 = scmp.eq.s32.totalorder %s16, 0
      %p51 = por %p49, %p50
      %p52 = scmp.ne.s32.totalorder %s38, %s39
      %p53 = scmp.eq.s32.totalorder %s17, 1
      %p54 = por %p52, %p53
      %p56 = scmp.ne.s32.totalorder %s39, %s55
      %p57 = scmp.eq.s32.totalorder %s17, 0
      %p58 = por %p56, %p57
      %s59 = ssub.s32 %s19, %s26
      %p60 = scmp.eq.s32.totalorder %s59, 0
      %s62 = sadd.s32 %s61, 1
      %s63 = scalar_select %p60, %s61, %s62
      %p66 = pneg %p60
      %p67 = scmp.eq.s32.totalorder %s11, 1
      %p68 = por %p66, %p67
      %p69 = scmp.ne.s32.totalorder %s61, %s64
      %p70 = scmp.eq.s32.totalorder %s11, 0
      %p71 = por %p69, %p70
      %p72 = scmp.ne.s32.totalorder %s61, %s64
      %p73 = scmp.eq.s32.totalorder %s16, 1
      %p74 = por %p72, %p73
      %p75 = scmp.ne.s32.totalorder %s64, %s65
      %p76 = scmp.eq.s32.totalorder %s16, 0
      %p77 = por %p75, %p76
      %p78 = scmp.ne.s32.totalorder %s64, %s65
      %p79 = scmp.eq.s32.totalorder %s17, 1
      %p80 = por %p78, %p79
      %p82 = scmp.ne.s32.totalorder %s65, %s81
      %p83 = scmp.eq.s32.totalorder %s17, 0
      %p84 = por %p82, %p83
      %s86 = sadd.s32 %s85, 1
      %p89 = scmp.eq.s32.totalorder %s11, 1
      %p90 = scmp.ne.s32.totalorder %s85, %s87
      %p91 = scmp.eq.s32.totalorder %s11, 0
      %p92 = por %p90, %p91
      %p93 = scmp.ne.s32.totalorder %s85, %s87
      %p94 = scmp.eq.s32.totalorder %s16, 1
      %p95 = por %p93, %p94
      %p96 = scmp.ne.s32.totalorder %s87, %s88
      %p97 = scmp.eq.s32.totalorder %s16, 0
      %p98 = por %p96, %p97
      %p99 = scmp.ne.s32.totalorder %s87, %s88
      %p100 = scmp.eq.s32.totalorder %s17, 1
      %p101 = por %p99, %p100
      %p103 = scmp.ne.s32.totalorder %s88, %s102
      %p104 = scmp.eq.s32.totalorder %s17, 0
      %p105 = por %p103, %p104
      %s107 = sadd.s32 %s106, 1
      %p110 = scmp.eq.s32.totalorder %s11, 1
      %p111 = scmp.ne.s32.totalorder %s106, %s108
      %p112 = scmp.eq.s32.totalorder %s11, 0
      %p113 = por %p111, %p112
      %p114 = scmp.ne.s32.totalorder %s106, %s108
      %p115 = scmp.eq.s32.totalorder %s16, 1
      %p116 = por %p114, %p115
      %p117 = scmp.ne.s32.totalorder %s108, %s109
      %p118 = scmp.eq.s32.totalorder %s16, 0
      %p119 = por %p117, %p118
      %p120 = scmp.ne.s32.totalorder %s108, %s109
      %p121 = scmp.eq.s32.totalorder %s17, 1
      %p122 = por %p120, %p121
      %p124 = scmp.ne.s32.totalorder %s109, %s123
      %p125 = scmp.eq.s32.totalorder %s17, 0
      %p126 = por %p124, %p125
      %s128 = sadd.s32 %s127, 1
      %p131 = scmp.eq.s32.totalorder %s11, 1
      %p132 = scmp.ne.s32.totalorder %s127, %s129
      %p133 = scmp.eq.s32.totalorder %s11, 0
      %p134 = por %p132, %p133
      %p135 = scmp.ne.s32.totalorder %s127, %s129
      %p136 = scmp.eq.s32.totalorder %s16, 1
      %p137 = por %p135, %p136
      %p138 = scmp.ne.s32.totalorder %s129, %s130
      %p139 = scmp.eq.s32.totalorder %s16, 0
      %p140 = por %p138, %p139
      %p141 = scmp.ne.s32.totalorder %s129, %s130
      %p142 = scmp.eq.s32.totalorder %s17, 1
      %p143 = por %p141, %p142
      %p145 = scmp.ne.s32.totalorder %s130, %s144
      %p146 = scmp.eq.s32.totalorder %s17, 0
      %p147 = por %p145, %p146
      %s148 = ssub.s32 %s18, %s30
      %p149 = scmp.eq.s32.totalorder %s148, 0
      %s151 = sadd.s32 %s150, 1
      %s152 = scalar_select %p149, %s150, %s151
      %p155 = pneg %p149
      %p156 = scmp.eq.s32.totalorder %s11, 1
      %p157 = por %p155, %p156
      %p158 = scmp.ne.s32.totalorder %s150, %s153
      %p159 = scmp.eq.s32.totalorder %s11, 0
      %p160 = por %p158, %p159
      %p161 = scmp.ne.s32.totalorder %s150, %s153
      %p162 = scmp.eq.s32.totalorder %s16, 1
      %p163 = por %p161, %p162
      %p164 = scmp.ne.s32.totalorder %s153, %s154
      %p165 = scmp.eq.s32.totalorder %s16, 0
      %p166 = por %p164, %p165
      %p167 = scmp.ne.s32.totalorder %s153, %s154
      %p168 = scmp.eq.s32.totalorder %s17, 1
      %p169 = por %p167, %p168
      %p171 = scmp.ne.s32.totalorder %s154, %s170
      %p172 = scmp.eq.s32.totalorder %s17, 0
      %p173 = por %p171, %p172
      %p174 = scmp.le.s32.totalorder 1, %s11
      %p175 = scmp.lt.s32.totalorder %s11, 3
      %p176 = pnand %p174, %p175
      %p177 = pneg %p176
      // Predicated region
      $region9: #{omni_attention.1} parent=5 // pred_check
        _
      $region10: #{omni_attention.1} parent=5 // pred_check_branch
        %179 = sbr.rel (%p176) target = $region12
      $region11: #{omni_attention.1} parent=5 // pred_region
        %s180 = ssub.s32 %s11, 1
        // Predicated region
        $region13: #{omni_attention.1} parent=11 // pred_check
          %p181 = pneg %p98
        $region14: #{omni_attention.1} parent=11 // pred_check_branch
          %183 = sbr.rel (%p181) target = $region16
        $region15: #{omni_attention.1} parent=11 // pred_region
          _
        $region16: #{omni_attention.1} parent=11 // pred_fallthru
          _
        // Predicated region
        $region17: #{omni_attention.1} parent=11 // pred_check
          %p184 = pneg %p119
        $region18: #{omni_attention.1} parent=11 // pred_check_branch
          %186 = sbr.rel (%p184) target = $region20
        $region19: #{omni_attention.1} parent=11 // pred_region
          _
        $region20: #{omni_attention.1} parent=11 // pred_fallthru
          _
        // Predicated region
        $region21: #{omni_attention.1} parent=11 // pred_check
          %p187 = pneg %p140
        $region22: #{omni_attention.1} parent=11 // pred_check_branch
          %189 = sbr.rel (%p187) target = $region24
        $region23: #{omni_attention.1} parent=11 // pred_region
          _
        $region24: #{omni_attention.1} parent=11 // pred_fallthru
          _
      $region12: #{omni_attention.1} parent=5 // pred_fallthru
        _
      %p190 = scmp.lt.s32.totalorder %s11, 2
      // Predicated region
      $region25: #{omni_attention.1} parent=5 // pred_check
        %p191 = pneg %p190
      $region26: #{omni_attention.1} parent=5 // pred_check_branch
        %193 = sbr.rel (%p191) target = $region28
      $region27: #{omni_attention.1} parent=5 // pred_region
        // Predicated region
        $region29: #{omni_attention.1} parent=27 // pred_check
          %p194 = pneg %p45
        $region30: #{omni_attention.1} parent=27 // pred_check_branch
          %196 = sbr.rel (%p194) target = $region32
        $region31: #{omni_attention.1} parent=27 // pred_region
          %s197 = sand.u32 %s35, 1
          %s198 = sand.u32 %s35, 1
          %s199 = smul.addr %s198, 64
          %s200 = scalar_lea.vmem [#allocation3], %s199
          %s201 = smul.u32 2, %s18
          %s202 = smul.u32 2, %s19
          %s203 = smul.addr %s202, 2
          %s204 = smul.addr %s201, 8
          %s205 = sadd.s32 %s203, %s204
          %s206 = smul.addr %s205, 8
          %s207 = scalar_lea.vmem %s0, %s206
          // Predicated region
          $region33: #{omni_attention.1} parent=31 // pred_check
            _
          $region34: #{omni_attention.1} parent=31 // pred_check_branch
            %209 = sbr.rel (0) target = $region36
          $region35: #{omni_attention.1} parent=31 // pred_region
            // Predicated region
            $region37: #{omni_attention.1} parent=35 // pred_check
              _
            $region38: #{omni_attention.1} parent=35 // pred_check_branch
              %211 = sbr.rel (0) target = $region40
            $region39: #{omni_attention.1} parent=35 // pred_region
              loop: start=0, step=1, limit=1
              $region41: #{omni_attention.1} parent=39 // loop_pre_header
                _
              $region42: #{omni_attention.1} parent=39 // loop_header
                %s213 = sphi 0, %s217
                %p214 = scmp.ge.s32.totalorder %s213, 1
                %s218 = sphi %s207, %s207
                %s219 = sphi %s200, %s200
              $region43: #{omni_attention.1} parent=39 // loop_header_branch
                %216 = sbr.rel (%p214) target = $region47
              $region44: #{omni_attention.1} parent=39 // loop_body
                %v220 = vld [vmem:[%s218] sm:$0xff]
                %221 = vst [vmem:[%s219] sm:$0xff] %v220
                %v222 = vld [vmem:[%s218 + $0x8] sm:$0xff]
                %223 = vst [vmem:[%s219 + $0x8] sm:$0xff] %v222
                %v224 = vld [vmem:[%s218 + $0x10] sm:$0xff]
                %225 = vst [vmem:[%s219 + $0x10] sm:$0xff] %v224
                %v226 = vld [vmem:[%s218 + $0x18] sm:$0xff]
                %227 = vst [vmem:[%s219 + $0x18] sm:$0xff] %v226
                %v228 = vld [vmem:[%s218 + $0x40] sm:$0xff]
                %229 = vst [vmem:[%s219 + $0x20] sm:$0xff] %v228
                %v230 = vld [vmem:[%s218 + $0x48] sm:$0xff]
                %231 = vst [vmem:[%s219 + $0x28] sm:$0xff] %v230
                %v232 = vld [vmem:[%s218 + $0x50] sm:$0xff]
                %233 = vst [vmem:[%s219 + $0x30] sm:$0xff] %v232
                %v234 = vld [vmem:[%s218 + $0x58] sm:$0xff]
                %235 = vst [vmem:[%s219 + $0x38] sm:$0xff] %v234
              $region45: #{omni_attention.1} parent=39 // loop_footer
                %s217 = sadd.s32 1, %s213
              $region46: #{omni_attention.1} parent=39 // loop_footer_branch
                %212 = sbr.rel target = $region42
              $region47: #{omni_attention.1} parent=39 // loop_exit
                _
            $region40: #{omni_attention.1} parent=35 // pred_fallthru
              _
            // Predicated region
            $region48: #{omni_attention.1} parent=35 // pred_check
              _
            $region49: #{omni_attention.1} parent=35 // pred_check_branch
              %237 = sbr.rel target = $region51
            $region50: #{omni_attention.1} parent=35 // pred_region
              _
            $region51: #{omni_attention.1} parent=35 // pred_fallthru
              _
          $region36: #{omni_attention.1} parent=31 // pred_fallthru
            _
          %238 = vnop
        $region32: #{omni_attention.1} parent=27 // pred_fallthru
          _
        // Predicated region
        $region52: #{omni_attention.1} parent=27 // pred_check
          %p239 = pneg %p71
        $region53: #{omni_attention.1} parent=27 // pred_check_branch
          %241 = sbr.rel (%p239) target = $region55
        $region54: #{omni_attention.1} parent=27 // pred_region
          %s242 = smul.u32 2, %s19
          %p243 = scmp.lt.s32.totalorder %s242, 3
          %s244 = scalar_select %p243, %s242, 3
          %s245 = smul.addr %s244, 8
          %s246 = scalar_lea.vmem %s1, %s245
          %s247 = smul.u32 2, %s19
        $region55: #{omni_attention.1} parent=27 // pred_fallthru
          _
      $region28: #{omni_attention.1} parent=5 // pred_fallthru
        _
      %p248 = scmp.le.s32.totalorder 1, %s11
      %p249 = scmp.lt.s32.totalorder %s11, 3
      %p250 = pnand %p248, %p249
      %p251 = pneg %p250
      // Predicated region
      $region56: #{omni_attention.1} parent=5 // pred_check
        _
      $region57: #{omni_attention.1} parent=5 // pred_check_branch
        %253 = sbr.rel (%p250) target = $region59
      $region58: #{omni_attention.1} parent=5 // pred_region
        %s254 = ssub.s32 %s11, 1
        %s255 = sand.u32 %s38, 1
        %s256 = sand.u32 %s38, 1
        %s257 = smul.addr %s256, 64
        %s258 = scalar_lea.vmem [#allocation3], %s257
        // Predicated region
        $region60: #{omni_attention.1} parent=58 // pred_check
          %p259 = pneg %p51
        $region61: #{omni_attention.1} parent=58 // pred_check_branch
          %261 = sbr.rel (%p259) target = $region63
        $region62: #{omni_attention.1} parent=58 // pred_region
          _
        $region63: #{omni_attention.1} parent=58 // pred_fallthru
          _
        %s262 = sand.u32 %s38, 1
        %s263 = sand.u32 %s38, 1
        %s264 = smul.addr %s263, 64
        %s265 = scalar_lea.vmem [#allocation3], %s264
        %p266 = pneg %p51
        %p267 = pneg %p48
        %s268 = smul.u32 2, %s21
        %p269 = scmp.lt.s32.totalorder %s268, 3
        %s270 = scalar_select %p269, %s268, 3
        %s271 = smul.addr %s270, 8
        %s272 = scalar_lea.vmem %s1, %s271
        %p273 = pneg %p77
        %p274 = pneg %p74
        %p275 = pneg %p98
        %p276 = pneg %p95
        %p277 = pneg %p119
        %p278 = pneg %p116
        %p279 = pneg %p140
        %p280 = pneg %p137
        %p281 = pneg %p166
        %p282 = pneg %p163
        %p283 = scmp.lt.s32.totalorder %s20, 0
        %s284 = scalar_select %p283, %s20, 0
        %s285 = smul.addr %s284, 2
        %s286 = scalar_lea.vmem %s5, %s285
        %s287 = smul.u32 2, %s20
        %s288 = smul.u32 2, %s21
        %s289 = smul.u32 2, %s21
        %p290 = scmp.lt.s32.totalorder %s289, 3
        %s291 = scalar_select %p290, %s289, 3
        %s292 = smul.addr %s291, 8
        %s293 = scalar_lea.vmem %s1, %s292
        %s294 = smul.u32 2, %s21
        %p295 = scmp.lt.s32.totalorder %s20, 0
        %s296 = scalar_select %p295, %s20, 0
        %s297 = smul.addr %s296, 2
        %s298 = scalar_lea.vmem %s5, %s297
        %p299 = scmp.eq.s32.totalorder %s21, 0
        // Predicated region
        $region64: #{omni_attention.1} parent=58 // pred_check
          %p300 = pneg %p299
        $region65: #{omni_attention.1} parent=58 // pred_check_branch
          %302 = sbr.rel (%p300) target = $region67
        $region66: #{omni_attention.1} parent=58 // pred_region
          %vm303 = vcmask 123904
          %304 = vst.msk [vmem:[#allocation2] sm:$0x3] %vm303, 0.0
        $region67: #{omni_attention.1} parent=58 // pred_fallthru
          _
        %v305 = vld [vmem:[%s258] sm:$0xff]
        %v306 = vld [vmem:[%s258 + $0x8] sm:$0xff]
        %v307 = vld [vmem:[%s258 + $0x10] sm:$0xff]
        %v308 = vld [vmem:[%s258 + $0x18] sm:$0xff]
        %v309 = vld [vmem:[%s258 + $0x20] sm:$0xff]
        %v310 = vld [vmem:[%s258 + $0x28] sm:$0xff]
        %v311 = vld [vmem:[%s258 + $0x30] sm:$0xff]
        %v312 = vld [vmem:[%s258 + $0x38] sm:$0xff]
        %v313 = vadd.f32 %v305, %v306
        %314 = vadd.xlane.f32.xlu0 %v313
        %v315 = vpop.xlane.xlu0 %314
        %v316 = vadd.f32 %v307, %v308
        %317 = vadd.xlane.f32.xlu0 %v316
        %v318 = vpop.xlane.xlu0 %317
        %v319 = vadd.f32 %v309, %v310
        %320 = vadd.xlane.f32.xlu0 %v319
        %v321 = vpop.xlane.xlu0 %320
        %v322 = vadd.f32 %v311, %v312
        %323 = vadd.xlane.f32.xlu0 %v322
        %v324 = vpop.xlane.xlu0 %323
        %v325 = vmul.f32 %v315, 0.00390625
        %v326 = vmul.f32 %v318, 0.00390625
        %v327 = vmul.f32 %v321, 0.00390625
        %v328 = vmul.f32 %v324, 0.00390625
        %v329 = vld [vmem:[#allocation2] sm:$0x3]
        %v330 = vld [vmem:[%s293] sm:$0xff]
        %v331 = vld [vmem:[%s293 + $0x8] sm:$0xff]
        %v336 = vlaneseq
        %v337 = vand.u32 %v336, 127
        %v338 = vlaneseq
        %v339 = vshrl.u32 %v338, 7
        %v340 = vsub.s32 %v337, %v339
        %v341 = vrot.slane %v325, %v340
        %v342 = vadd.s32 %v337, 4294967288
        %v343 = vlaneseq
        %v344 = vshrl.u32 %v343, 7
        %v345 = vsub.s32 %v342, %v344
        %v346 = vrot.slane %v326, %v345
        %vm347 = vcmask 130112
        %v348 = vsel %vm347, %v346, %v341
        %v349 = vlaneseq
        %v350 = vshrl.u32 %v349, 7
        %v351 = vsub.s32 %v337, %v350
        %v352 = vrot.slane %v327, %v351
        %v353 = vlaneseq
        %v354 = vshrl.u32 %v353, 7
        %v355 = vsub.s32 %v342, %v354
        %v356 = vrot.slane %v328, %v355
        %v357 = vsel %vm347, %v356, %v352
        %vm358 = vcmask 1041409
        %v359 = vsel %vm358, %v357, %v348
        %vm360 = vcmask 130048
        %v361 = vsel %vm360, %v359, 0
        %363 = vmatprep.subr.mxu0 0.0
        %364 = vmatpush1.msra.mxu0 0.0
        %365 = vmatprep.subr.mxu0 0.0
        %366 = vmatpush1.msra.mxu0 0.0
        %367 = vmatprep.subr.mxu0 0.0
        %368 = vmatpush1.msra.mxu0 0.0
        %369 = vmatprep.subr.mxu0 0.0
        %370 = vmatpush1.msra.mxu0 0.0
        %371 = vmatprep.subr.mxu0 0.0
        %372 = vmatpush1.msra.mxu0 0.0
        %373 = vmatprep.subr.mxu0 0.0
        %374 = vmatpush1.msra.mxu0 0.0
        %375 = vmatprep.subr.mxu0 0.0
        %376 = vmatpush1.msra.mxu0 0.0
        %377 = vmatprep.subr.mxu0 0.0
        %378 = vmatpush1.msra.mxu0 0.0
        %379 = vmatprep.subr.mxu0 0.0
        %380 = vmatpush1.msra.mxu0 0.0
        %381 = vmatprep.subr.mxu0 0.0
        %382 = vmatpush1.msra.mxu0 0.0
        %383 = vmatprep.subr.mxu0 0.0
        %384 = vmatpush1.msra.mxu0 0.0
        %385 = vmatprep.subr.mxu0 0.0
        %386 = vmatpush1.msra.mxu0 0.0
        %387 = vmatprep.subr.mxu0 0.0
        %388 = vmatpush1.msra.mxu0 0.0
        %389 = vmatprep.subr.mxu0 0.0
        %390 = vmatpush1.msra.mxu0 0.0
        %391 = vmatprep.subr.mxu0 0.0
        %392 = vmatpush1.msra.mxu0 %v331
        %393 = vmatprep.subr.mxu0 0.0
        %394 = vmatpush1.msra.mxu0 %v330
        %395 = vmatprep.subr.mxu0 0.0
        %396 = vmatpush2.msra.mxu0 0.0
        %397 = vmatprep.subr.mxu0 0.0
        %398 = vmatpush2.msra.mxu0 0.0
        %399 = vmatprep.subr.mxu0 0.0
        %400 = vmatpush2.msra.mxu0 0.0
        %401 = vmatprep.subr.mxu0 0.0
        %402 = vmatpush2.msra.mxu0 0.0
        %403 = vmatprep.subr.mxu0 0.0
        %404 = vmatpush2.msra.mxu0 0.0
        %405 = vmatprep.subr.mxu0 0.0
        %406 = vmatpush2.msra.mxu0 0.0
        %407 = vmatprep.subr.mxu0 0.0
        %408 = vmatpush2.msra.mxu0 0.0
        %409 = vmatprep.subr.mxu0 0.0
        %410 = vmatpush2.msra.mxu0 0.0
        %411 = vmatprep.subr.mxu0 0.0
        %412 = vmatpush2.msra.mxu0 0.0
        %413 = vmatprep.subr.mxu0 0.0
        %414 = vmatpush2.msra.mxu0 0.0
        %415 = vmatprep.subr.mxu0 0.0
        %416 = vmatpush2.msra.mxu0 0.0
        %417 = vmatprep.subr.mxu0 0.0
        %418 = vmatpush2.msra.mxu0 0.0
        %419 = vmatprep.subr.mxu0 0.0
        %420 = vmatpush2.msra.mxu0 0.0
        %421 = vmatprep.subr.mxu0 0.0
        %422 = vmatpush2.msra.mxu0 0.0
        %423 = vmatprep.subr.mxu0 0.0
        %424 = vmatpush2.msra.mxu0 0.0
        %425 = vmatprep.subr.mxu0 0.0
        %426 = vmatpush2.msra.mxu0 0.0
        %427 = vmatprep.mubr.f32.mxu0 0.0
        %428 = vmatmul.mubr.f32.gmra.mxu0 %v361
        %v429 = vpop.f32.mrf.mxu0
        %v430 = vadd.f32 0.0, %v429
        %v431 = vpop.f32.mrf.mxu0
        %432 = vdwg.mxu0
        %v433 = vadd.f32 %v329, %v430
        %vm434 = vcmask 123904
        %435 = vst.msk [vmem:[#allocation2] sm:$0x3] %vm434, %v433
        %p436 = scmp.eq.s32.totalorder %s21, 1
        // Predicated region
        $region68: #{omni_attention.1} parent=58 // pred_check
          %p437 = pneg %p436
        $region69: #{omni_attention.1} parent=58 // pred_check_branch
          %439 = sbr.rel (%p437) target = $region71
        $region70: #{omni_attention.1} parent=58 // pred_region
          %v440 = vld [vmem:[#allocation2] sm:$0x3]
          %v441 = vld [vmem:[%s2] sm:$0x1]
          %v443 = vlaneseq
          %v444 = vshrl.u32 %v443, 7
          %v445 = vsub.s32 0, %v444
          %v446 = vrot.slane %v441, %v445
          %v448 = vadd.f32 %v440, %v446
          %v449 = vmax.f32 %v448, 0.0
          %v450 = vld [vmem:[%s3] sm:$0xff]
          %v451 = vld [vmem:[%s3 + $0x8] sm:$0xff]
          %v452 = vld [vmem:[%s4] sm:$0x1]
          %v454 = vlaneseq
          %v455 = vshrl.u32 %v454, 7
          %v456 = vsub.s32 0, %v455
          %v457 = vrot.slane %v452, %v456
          %v460 = vsel %vm360, %v449, 0
          %462 = vmatprep.subr.mxu0 0.0
          %463 = vmatpush1.msra.mxu0 0.0
          %464 = vmatprep.subr.mxu0 0.0
          %465 = vmatpush1.msra.mxu0 0.0
          %466 = vmatprep.subr.mxu0 0.0
          %467 = vmatpush1.msra.mxu0 0.0
          %468 = vmatprep.subr.mxu0 0.0
          %469 = vmatpush1.msra.mxu0 0.0
          %470 = vmatprep.subr.mxu0 0.0
          %471 = vmatpush1.msra.mxu0 0.0
          %472 = vmatprep.subr.mxu0 0.0
          %473 = vmatpush1.msra.mxu0 0.0
          %474 = vmatprep.subr.mxu0 0.0
          %475 = vmatpush1.msra.mxu0 0.0
          %476 = vmatprep.subr.mxu0 0.0
          %477 = vmatpush1.msra.mxu0 0.0
          %478 = vmatprep.subr.mxu0 0.0
          %479 = vmatpush1.msra.mxu0 0.0
          %480 = vmatprep.subr.mxu0 0.0
          %481 = vmatpush1.msra.mxu0 0.0
          %482 = vmatprep.subr.mxu0 0.0
          %483 = vmatpush1.msra.mxu0 0.0
          %484 = vmatprep.subr.mxu0 0.0
          %485 = vmatpush1.msra.mxu0 0.0
          %486 = vmatprep.subr.mxu0 0.0
          %487 = vmatpush1.msra.mxu0 0.0
          %488 = vmatprep.subr.mxu0 0.0
          %489 = vmatpush1.msra.mxu0 0.0
          %490 = vmatprep.subr.mxu0 0.0
          %491 = vmatpush1.msra.mxu0 %v451
          %492 = vmatprep.subr.mxu0 0.0
          %493 = vmatpush1.msra.mxu0 %v450
          %494 = vmatprep.subr.mxu0 0.0
          %495 = vmatpush2.msra.mxu0 0.0
          %496 = vmatprep.subr.mxu0 0.0
          %497 = vmatpush2.msra.mxu0 0.0
          %498 = vmatprep.subr.mxu0 0.0
          %499 = vmatpush2.msra.mxu0 0.0
          %500 = vmatprep.subr.mxu0 0.0
          %501 = vmatpush2.msra.mxu0 0.0
          %502 = vmatprep.subr.mxu0 0.0
          %503 = vmatpush2.msra.mxu0 0.0
          %504 = vmatprep.subr.mxu0 0.0
          %505 = vmatpush2.msra.mxu0 0.0
          %506 = vmatprep.subr.mxu0 0.0
          %507 = vmatpush2.msra.mxu0 0.0
          %508 = vmatprep.subr.mxu0 0.0
          %509 = vmatpush2.msra.mxu0 0.0
          %510 = vmatprep.subr.mxu0 0.0
          %511 = vmatpush2.msra.mxu0 0.0
          %512 = vmatprep.subr.mxu0 0.0
          %513 = vmatpush2.msra.mxu0 0.0
          %514 = vmatprep.subr.mxu0 0.0
          %515 = vmatpush2.msra.mxu0 0.0
          %516 = vmatprep.subr.mxu0 0.0
          %517 = vmatpush2.msra.mxu0 0.0
          %518 = vmatprep.subr.mxu0 0.0
          %519 = vmatpush2.msra.mxu0 0.0
          %520 = vmatprep.subr.mxu0 0.0
          %521 = vmatpush2.msra.mxu0 0.0
          %522 = vmatprep.subr.mxu0 0.0
          %523 = vmatpush2.msra.mxu0 0.0
          %524 = vmatprep.subr.mxu0 0.0
          %525 = vmatpush2.msra.mxu0 0.0
          %526 = vmatprep.mubr.f32.mxu0 0.0
          %527 = vmatmul.mubr.f32.gmra.mxu0 %v460
          %v528 = vpop.f32.mrf.mxu0
          %v529 = vadd.f32 %v457, %v528
          %v530 = vpop.f32.mrf.mxu0
          %531 = vdwg.mxu0
          %vm532 = vcmp.ge.s32.totalorder %v337, 73
          %vm533 = vcmp.lt.s32.totalorder %v337, 77
          %vm534 = vmand %vm532, %vm533
          %v535 = vsel %vm534, %v529, -1e+30
          %vm536 = vcmask 1041408
          %v537 = vsel %vm536, %v535, -inf
          %538 = vmax.xlane.f32.xlu0 %v537
          %v539 = vpop.xlane.xlu0 %538
          %v540 = vsub.f32 %v535, %v539
          %v541 = vmul.f32 %v540, 1.442695
          %v542 = vpow.pop %v541
          %v543 = vsel %vm534, %v542, 0.0
          %v544 = vsel %vm536, %v543, 0.0
          %545 = vadd.xlane.f32.xlu0 %v544
          %v546 = vpop.xlane.xlu0 %545
          %v547 = vrcp.pop %v546
          %v548 = vmul.f32 %v543, %v547
          %v549 = vxor.u32 %v529, 2147483648
          %v550 = vmul.f32 %v549, 1.442695
          %v551 = vpow.pop %v550
          %v552 = vadd.f32 %v551, 1.0
          %v553 = vrcp.pop %v552
          %v554 = vmul.f32 1.0, %v553
          %v555 = vsel %vm534, %v548, %v554
          %556 = vst [vmem:[%s298] sm:$0x3] %v555
        $region71: #{omni_attention.1} parent=58 // pred_fallthru
          _
        %p557 = scmp.lt.s32.totalorder %s20, 0
        %s558 = scalar_select %p557, %s20, 0
        %s559 = smul.addr %s558, 2
        %s560 = scalar_lea.vmem %s5, %s559
        // Predicated region
        $region72: #{omni_attention.1} parent=58 // pred_check
          %p561 = pneg %p163
        $region73: #{omni_attention.1} parent=58 // pred_check_branch
          %563 = sbr.rel (%p561) target = $region75
        $region74: #{omni_attention.1} parent=58 // pred_region
          _
        $region75: #{omni_attention.1} parent=58 // pred_fallthru
          _
        // Predicated region
        $region76: #{omni_attention.1} parent=58 // pred_check
          %p564 = pneg %p163
        $region77: #{omni_attention.1} parent=58 // pred_check_branch
          %566 = sbr.rel (%p564) target = $region79
        $region78: #{omni_attention.1} parent=58 // pred_region
          %p567 = scmp.lt.s32.totalorder %s20, 0
          %s568 = scalar_select %p567, %s20, 0
          %s569 = smul.addr %s568, 2
          %s570 = scalar_lea.vmem %s5, %s569
        $region79: #{omni_attention.1} parent=58 // pred_fallthru
          _
      $region59: #{omni_attention.1} parent=5 // pred_fallthru
        _
      %p571 = scmp.le.s32.totalorder 2, %s11
      // Predicated region
      $region80: #{omni_attention.1} parent=5 // pred_check
        %p572 = pneg %p571
      $region81: #{omni_attention.1} parent=5 // pred_check_branch
        %574 = sbr.rel (%p572) target = $region83
      $region82: #{omni_attention.1} parent=5 // pred_region
        %s575 = ssub.s32 %s11, 2
      $region83: #{omni_attention.1} parent=5 // pred_fallthru
        _
    $region6: #{omni_attention.1} parent=1 // loop_footer
      %s15 = sadd.s32 1, %s11
    $region7: #{omni_attention.1} parent=1 // loop_footer_branch
      %10 = sbr.rel target = $region3
    $region8: #{omni_attention.1} parent=1 // loop_exit
      _

</llo_original>
